<compile_context>
chip_gen: v6e
topology: v6e:2x2x1
jax: 0.10.0
libtpu: 0.0.40
codegen_flags: <defaults>
</compile_context>

<pallas_src>
import functools

import jax
import jax.numpy as jnp
from jax.experimental import pallas as pl
from jax.experimental.pallas import tpu as pltpu


# ----------------------------------------------------------------------------- probes
@functools.lru_cache(maxsize=None)
def _roll_is_jnp_convention():
    """pltpu.roll is documented to match jnp.roll; probe once to be version-proof."""
    def k(x_ref, o_ref):
        o_ref[...] = pltpu.roll(x_ref[...], shift=1, axis=1)

    x = jnp.arange(8 * 128, dtype=jnp.float32).reshape(8, 128)
    out = pl.pallas_call(k, out_shape=jax.ShapeDtypeStruct((8, 128), jnp.float32))(x)
    # jnp.roll(x, 1)[0, 1] == x[0, 0] == 0.0 ; the opposite convention gives x[0, 2].
    return bool(out[0, 1] == 0.0)


# ----------------------------------------------------------------------------- kernel
def _make_ccnn2d_kernel(TB, Fo, K, H, W, roll_is_jnp):
    """One grid step processes TB samples: periodic shifts (pltpu.roll) build the
    (CKK, TB*N) patch matrix in VMEM, one stacked MXU matmul computes real & imag,
    bias + sReLU are fused, and the lane-dense output block is stored directly."""
    N = H * W
    KK = K * K

    def shift_left(arr, amount):
        # out[..., n] = arr[..., (n + amount) % N]  (static amount)
        amt = amount % N
        if amt == 0:
            return arr
        s = (N - amt) if roll_is_jnp else amt
        return pltpu.roll(arr, shift=s, axis=2)

    def kernel(x_ref, w_ref, b_ref, o_ref):
        f32 = jnp.float32
        x = x_ref[...]                                        # (TB, PC, N) lane-dense
        col = jax.lax.broadcasted_iota(jnp.int32, x.shape, 2) % W
        # Periodic 2-D shift on the flattened spatial axis:
        #   column shift dj : two rolls + per-lane select (handles the W wrap),
        #   row shift    di : one roll by di*W (H wrap is automatic modulo N).
        shifted = [None] * KK
        for dj in range(K):
            if dj == 0:
                base = x
            else:
                a = shift_left(x, dj)          # j + dj <  W
                b = shift_left(x, dj - W)      # j + dj >= W (wraps within the row)
                base = jnp.where(col < (W - dj), a, b)
            for di in range(K):
                shifted[di * K + dj] = shift_left(base, di * W)

        # Patch matrix (PC*KK, TB*N): rows ordered (shift, plane, channel) to match
        # the stacked weight columns; the batch tile is concatenated along lanes.
        cols = []
        for tb in range(TB):
            cols.append(jnp.concatenate([shifted[s][tb] for s in range(KK)], axis=0))
        patches = cols[0] if TB == 1 else jnp.concatenate(cols, axis=1)

        # Single stacked matmul: rows [0, Fo) -> real, rows [Fo, 2Fo) -> imag.
        acc = jnp.dot(w_ref[...], patches, preferred_element_type=f32) + b_ref[...]
        real = acc[:Fo, :]
        imag = acc[Fo:, :]
        # sReLU: keep z iff -pi/2 < angle(z) < pi/2 ; atan2(0, 0) == 0 counts inside.
        mask = ((real > 0.0) | ((real == 0.0) & (imag == 0.0))).astype(f32)
        real = real * mask
        imag = imag * mask
        for tb in range(TB):
            o_ref[tb, 0] = real[:, tb * N:(tb + 1) * N]
            o_ref[tb, 1] = imag[:, tb * N:(tb + 1) * N]

    return kernel


# ----------------------------------------------------------------------------- tiling
def _plan_tiles(B, PCpad, N, Fo, KK, item, batch_tile):
    """Pick batch tile TB and vmem_limit_bytes from the actual VMEM capacity."""
    try:
        cap = int(pltpu.get_tpu_info().vmem_capacity_bytes)   # 64 MiB v7x, 128 MiB v5e/v6e
    except Exception:
        cap = 64 * 1024 * 1024                                # safe for every generation
    budget = int(cap * 0.70)

    def need(tb):
        in_blk = tb * PCpad * N * item
        out_blk = tb * 2 * Fo * N * 4
        live = (2 * KK + 4) * in_blk + 4 * out_blk            # shifted slabs + patches + temps
        w_b = 2 * (2 * Fo * KK * PCpad * item + 2 * Fo * 4)
        return 2 * (in_blk + out_blk) + live + w_b + (2 << 20)

    if batch_tile is None:
        divs = [d for d in range(1, min(B, 8) + 1) if B % d == 0]
        pref = [d for d in divs if B // d >= 2] or divs       # >=2 grid steps feeds both v7x TCs
        tb = 1
        for d in pref:
            if need(d) <= budget:
                tb = d
    else:
        tb = int(batch_tile)
    vmem_limit = int(min(max(int(need(tb) * 1.5), 32 * 1024 * 1024), int(cap * 0.92)))
    return tb, vmem_limit


# ---------------------------------------------------------------------------- wrapper
def cnn2d_complex_layer(x, w_re, w_im, b_re, b_im, *, K, layer_name='mid',
                        pbc=True, mxu_dtype=jnp.float32, batch_tile=None):
    """Forward of CNN2d_complex_layer (ComplexConv 2D + sReLU, periodic padding).

    layer_name == 'mid': x is (B, 2, F, H, W)   complex input (two real planes)
    layer_name == '1st': x is (B, Dp, H, W)     real input (imaginary plane == 0)
    w_re, w_im: (F_out, C_in, K, K) PyTorch Conv2d layout;  b_re, b_im: (F_out,)
    Returns (B, 2, F_out, Ho, Wo) float32.
    """
    f32 = jnp.float32
    x = jnp.asarray(x, f32)
    w_re = jnp.asarray(w_re, f32)
    w_im = jnp.asarray(w_im, f32)
    b_re = jnp.asarray(b_re, f32)
    b_im = jnp.asarray(b_im, f32)
    Fo, Cin = w_re.shape[0], w_re.shape[1]
    KK = K * K

    # Weight columns ordered (shift, plane, channel) to match the in-kernel patch rows.
    wr_ord = w_re.transpose(0, 2, 3, 1).reshape(Fo, KK, Cin)
    wi_ord = w_im.transpose(0, 2, 3, 1).reshape(Fo, KK, Cin)
    if layer_name == '1st':
        B, Dp, H, W = x.shape
        assert Dp == Cin, (Dp, Cin)
        x2 = x.reshape(B, Dp, H * W)                          # free reshape
        w_top, w_bot = wr_ord, wi_ord                         # real = Wr@P, imag = Wi@P
    else:
        B = x.shape[0]
        H, W = x.shape[3], x.shape[4]
        assert x.shape[1] == 2 and x.shape[2] == Cin, x.shape
        x2 = x.reshape(B, 2 * Cin, H * W)                     # rows = (plane, channel)
        w_top = jnp.concatenate([wr_ord, -wi_ord], axis=2)    # real = Wr@Pr - Wi@Pi
        w_bot = jnp.concatenate([wi_ord, wr_ord], axis=2)     # imag = Wi@Pr + Wr@Pi
    N = H * W
    PC = x2.shape[1]

    # Pad channel-plane rows to a sublane-tile multiple (8 f32 / 16 bf16) so the
    # per-shift slab concatenation in the kernel stays tile-aligned.
    item = jnp.dtype(mxu_dtype).itemsize
    sub = 8 * max(1, 4 // item)
    PCpad = ((PC + sub - 1) // sub) * sub
    if PCpad != PC:
        x2 = jnp.pad(x2, ((0, 0), (0, PCpad - PC), (0, 0)))
        w_top = jnp.pad(w_top, ((0, 0), (0, 0), (0, PCpad - PC)))
        w_bot = jnp.pad(w_bot, ((0, 0), (0, 0), (0, PCpad - PC)))
    w_stack = jnp.concatenate([w_top.reshape(Fo, KK * PCpad),
                               w_bot.reshape(Fo, KK * PCpad)], axis=0)  # (2Fo, KK*PCpad)
    # conv_im's bias is applied even to a zero imaginary plane, so both layer kinds
    # use the same combined biases.
    b_stack = jnp.concatenate([b_re - b_im, b_re + b_im]).reshape(2 * Fo, 1)

    x2 = x2.astype(mxu_dtype)
    w_stack = w_stack.astype(mxu_dtype)

    TB, vmem_limit = _plan_tiles(B, PCpad, N, Fo, KK, item, batch_tile)
    assert B % TB == 0, (B, TB)

    cost = pl.CostEstimate(
        flops=2 * (2 * Fo) * (KK * PCpad) * (B * N),
        transcendentals=0,
        bytes_accessed=B * PCpad * N * item + 2 * Fo * KK * PCpad * item
        + B * 2 * Fo * N * 4,
    )

    kernel = _make_ccnn2d_kernel(TB, Fo, K, H, W, _roll_is_jnp_convention())
    out = pl.pallas_call(
        kernel,
        grid=(B // TB,),
        in_specs=[
            pl.BlockSpec((TB, PCpad, N), lambda b: (b, 0, 0)),
            pl.BlockSpec((2 * Fo, KK * PCpad), lambda b: (0, 0)),   # resident weights
            pl.BlockSpec((2 * Fo, 1), lambda b: (0, 0)),            # resident bias
        ],
        out_specs=pl.BlockSpec((TB, 2, Fo, N), lambda b: (b, 0, 0, 0)),
        out_shape=jax.ShapeDtypeStruct((B, 2, Fo, N), f32),
        compiler_params=pltpu.CompilerParams(
            dimension_semantics=("parallel",),
            vmem_limit_bytes=vmem_limit),
        cost_estimate=cost,
    )(x2, w_stack, b_stack)

    out = out.reshape(B, 2, Fo, H, W)
    if not pbc:
        # The periodic result is computed everywhere; the VALID region is identical.
        out = out[:, :, :, :H - K + 1, :W - K + 1]
    return out


# -------------------------------------------------------------------------- reference
def _reference(x, w_re, w_im, b_re, b_im, K, layer_name='mid', pbc=True,
               precision=jax.lax.Precision.HIGHEST):
    """Pure-JAX reference matching the PyTorch forward (ComplexConv 2D + sReLU)."""
    x = x.astype(jnp.float32)
    if layer_name == '1st':
        x = jnp.stack((x, jnp.zeros_like(x)), axis=1)
    if pbc:
        x = jnp.concatenate((x, x[:, :, :, 0:K - 1, :]), axis=-2)
        x = jnp.concatenate((x, x[:, :, :, :, 0:K - 1]), axis=-1)
    xr, xi = x[:, 0], x[:, 1]

    def conv(u, w, b):
        out = jax.lax.conv_general_dilated(
            u, w.astype(jnp.float32), window_strides=(1, 1), padding='VALID',
            dimension_numbers=('NCHW', 'OIHW', 'NCHW'), precision=precision)
        return out + b[None, :, None, None]

    real = conv(xr, w_re, b_re) - conv(xi, w_im, b_im)
    imag = conv(xi, w_re, b_re) + conv(xr, w_im, b_im)
    mask = ((real > 0) | ((real == 0) & (imag == 0))).astype(jnp.float32)
    return jnp.stack((real * mask, imag * mask), axis=1)


def _matches(out, ref, atol):
    diff = jnp.abs(out - ref)
    bad = diff > atol
    if not bool(jnp.any(bad)):
        return True
    # Tolerate sReLU mask flips at numerically-zero real parts (exact-zero comparison
    # in the activation can flip under different summation orders).
    flip = (jnp.abs(ref[:, 0]) <= atol) & (jnp.abs(out[:, 0]) <= atol)
    bad = bad & ~flip[:, None]
    return not bool(jnp.any(bad))


def _assert_close(out, refs, atol):
    assert any(_matches(out, r, atol) for r in refs), "kernel output mismatch"


# ------------------------------------------------------------------------------- demo
if __name__ == "__main__":
    B, F, H, W, K = 2, 8, 16, 16, 3
    key = jax.random.PRNGKey(0)
    kx, kwr, kwi, kbr, kbi, kx1 = jax.random.split(key, 6)

    bound = 1.0 / (F * K * K) ** 0.5
    x = jax.random.normal(kx, (B, 2, F, H, W), dtype=jnp.float32)
    w_re = jax.random.uniform(kwr, (F, F, K, K), jnp.float32, -bound, bound)
    w_im = jax.random.uniform(kwi, (F, F, K, K), jnp.float32, -bound, bound)
    b_re = jax.random.uniform(kbr, (F,), jnp.float32, -bound, bound)
    b_im = jax.random.uniform(kbi, (F,), jnp.float32, -bound, bound)

    # 'mid' layer, f32 MXU operands (compare against both HIGHEST and DEFAULT refs so
    # the check is robust to the MXU's default f32 matmul precision mode).
    out = jax.block_until_ready(
        cnn2d_complex_layer(x, w_re, w_im, b_re, b_im, K=K, layer_name='mid', pbc=True))
    assert out.shape == (B, 2, F, H, W), out.shape
    refs = [_reference(x, w_re, w_im, b_re, b_im, K, 'mid', True, p)
            for p in (jax.lax.Precision.HIGHEST, jax.lax.Precision.DEFAULT)]
    _assert_close(out, refs, atol=1e-4)

    # 'mid' layer, bf16 MXU operands (perf path for v6e/v7x); compare against a
    # reference fed the same bf16-rounded operands (only accumulation order differs).
    out_bf = jax.block_until_ready(
        cnn2d_complex_layer(x, w_re, w_im, b_re, b_im, K=K, layer_name='mid',
                            pbc=True, mxu_dtype=jnp.bfloat16))
    xb = x.astype(jnp.bfloat16).astype(jnp.float32)
    wrb = w_re.astype(jnp.bfloat16).astype(jnp.float32)
    wib = w_im.astype(jnp.bfloat16).astype(jnp.float32)
    refs_bf = [_reference(xb, wrb, wib, b_re, b_im, K, 'mid', True, p)
               for p in (jax.lax.Precision.HIGHEST, jax.lax.Precision.DEFAULT)]
    _assert_close(out_bf, refs_bf, atol=1e-2)

    # '1st' layer: real input (B, Dp, H, W), Dp = 2 (onehot encoding).
    Dp = 2
    bound1 = 1.0 / (Dp * K * K) ** 0.5
    x1 = jax.random.normal(kx1, (B, Dp, H, W), dtype=jnp.float32)
    w1_re = jax.random.uniform(kwr, (F, Dp, K, K), jnp.float32, -bound1, bound1)
    w1_im = jax.random.uniform(kwi, (F, Dp, K, K), jnp.float32, -bound1, bound1)
    out1 = jax.block_until_ready(
        cnn2d_complex_layer(x1, w1_re, w1_im, b_re, b_im, K=K, layer_name='1st', pbc=True))
    assert out1.shape == (B, 2, F, H, W), out1.shape
    refs1 = [_reference(x1, w1_re, w1_im, b_re, b_im, K, '1st', True, p)
             for p in (jax.lax.Precision.HIGHEST, jax.lax.Precision.DEFAULT)]
    _assert_close(out1, refs1, atol=1e-4)

    print("KERNEL_OK")
</pallas_src>

<mosaic_0001>
module attributes {stable_mosaic.version = 11 : i64} {
  func.func @k(%arg0: memref<8x128xf32, #tpu.memory_space<vmem>>, %arg1: memref<8x128xf32, #tpu.memory_space<vmem>>) attributes {dimension_semantics = [], scalar_prefetch = 0 : i64, scratch_operands = 0 : i64, tpu.core_type = #tpu.core_type<tc>} {
    %c0 = arith.constant 0 : index
    %c0_0 = arith.constant 0 : index
    %0 = vector.load %arg0[%c0, %c0_0] : memref<8x128xf32, #tpu.memory_space<vmem>>, vector<8x128xf32>
    %c1_i32 = arith.constant 1 : i32
    %1 = tpu.dynamic_rotate %0 by %c1_i32 dim 1 : vector<8x128xf32>, i32 -> vector<8x128xf32>
    %c0_1 = arith.constant 0 : index
    %c0_2 = arith.constant 0 : index
    %2 = vector.load %arg1[%c0_1, %c0_2] : memref<8x128xf32, #tpu.memory_space<vmem>>, vector<8x128xf32>
    tpu.vector_store %arg1[%c0_1, %c0_2], %1 {strides = array<i32>} : memref<8x128xf32, #tpu.memory_space<vmem>>, vector<8x128xf32>,
    return
  }
}

</mosaic_0001>

<llo_original>
// kernel: tpu_custom_call.1
$region0: #{tpu_custom_call.1}
  #allocation0 [shape = 'u32[]', space=smem, size = 0x4, offset = 0x4, fixed_abs, tag = 'smem constant byte address 0x4 - core index']
  #allocation1 [shape = 'u32[144,128]{1,0:T(1,128)}', space=vmem, size = 0x12000, scoped, tag = 'internal scratch']
  %s0 = inlined_call_operand.hbm [shape: f32[8,128], index: 0, kind: input, shape index: {}]
  %s1 = inlined_call_operand.hbm [shape: f32[8,128], index: 1, kind: output, shape index: {}]
  %s2 = sld [smem:[#allocation0]]
  $region18: #{tpu_custom_call.1} parent=0
    _
  %s4 = ssub.s32 1, %s2
  %s5 = scalar_select 0, %s4, %s2
  $region1: #{tpu_custom_call.1} parent=0
    #allocation2 [shape = 'u8[4096]{0}', space=vmem, size = 0x1000, scoped, tag = 'input window, operand 0, single buffered']
    #allocation3 [shape = 's32[1]{0}', space=sflag, size = 0x4, scoped, tag = 'scoped memory for tpu_custom_call.1']
    #allocation4 [shape = 's32[1]{0}', space=sflag, size = 0x4, scoped, tag = 'scoped memory for tpu_custom_call.1']
    #allocation5 [shape = 'u8[4096]{0}', space=vmem, size = 0x1000, scoped, tag = 'output window, operand 0, single buffered']
    %6 = vsyncpa [#allocation3], 0
    %7 = vsyncpa [#allocation4], 0
    // Predicated region
    $region2: #{tpu_custom_call.1} parent=1 // pred_check
      _
    $region3: #{tpu_custom_call.1} parent=1 // pred_check_branch
      %9 = sbr.rel (0) target = $region5
    $region4: #{tpu_custom_call.1} parent=1 // pred_region
      %s11 = ssub.s32 128, 128
      %12 = vsyncadd [#allocation3], %s11
      %s14 = sshll.u32 [#allocation2], 4
      %s15 = int_to_ptr.vmem [resolvable:$true] %s14
      %17 = dma.hbm_to_vmem [thread:$0]  %s0, 128, %s15, [#allocation3]
    $region5: #{tpu_custom_call.1} parent=1 // pred_fallthru
      _
    // Predicated region
    $region6: #{tpu_custom_call.1} parent=1 // pred_check
      _
    $region7: #{tpu_custom_call.1} parent=1 // pred_check_branch
      %19 = sbr.rel (0) target = $region9
    $region8: #{tpu_custom_call.1} parent=1 // pred_region
      %20 = dma.done [#allocation3], 128
    $region9: #{tpu_custom_call.1} parent=1 // pred_fallthru
      _
    %v21 = vld [vmem:[#allocation2] sm:$0xff]
    %22 = vrot.lane.b32.xlu0 %v21, 1
    %v23 = vpop.permute.xlu0 %22
    %24 = vst [vmem:[#allocation5] sm:$0xff] %v23
    // Predicated region
    $region10: #{tpu_custom_call.1} parent=1 // pred_check
      _
    $region11: #{tpu_custom_call.1} parent=1 // pred_check_branch
      %26 = sbr.rel (0) target = $region13
    $region12: #{tpu_custom_call.1} parent=1 // pred_region
      %s28 = ssub.s32 128, 128
      %29 = vsyncadd [#allocation4], %s28
      %s31 = sshll.u32 [#allocation5], 4
      %s32 = int_to_ptr.vmem [resolvable:$true] %s31
      %34 = dma.vmem_to_hbm [thread:$0]  %s32, 128, %s1, [#allocation4]
    $region13: #{tpu_custom_call.1} parent=1 // pred_fallthru
      _
    // Predicated region
    $region14: #{tpu_custom_call.1} parent=1 // pred_check
      _
    $region15: #{tpu_custom_call.1} parent=1 // pred_check_branch
      %36 = sbr.rel (0) target = $region17
    $region16: #{tpu_custom_call.1} parent=1 // pred_region
      %37 = dma.done [#allocation4], 128
    $region17: #{tpu_custom_call.1} parent=1 // pred_fallthru
      _
    %38 = vsyncpa [#allocation3], 1
    %39 = vsyncpa [#allocation4], 1

</llo_original>
